<compile_context>
chip_gen: v6e
topology: v6e:2x2x1
jax: 0.10.0
libtpu: 0.0.40
codegen_flags: <defaults>
</compile_context>

<pallas_src>
import jax
import jax.numpy as jnp
from jax.experimental import pallas as pl
from jax.experimental.pallas import tpu as pltpu

IN_F, HID_F, OUT_F = 4, 10, 1   # layer_numbers = [4, 10, 1]
LANES = 128                     # batch maps to (row, lane); lane axis is dense
ROWS_MAX = 512                  # 512*128 = 65536 batch elems / block = 1 MiB f32 in


def _sigmoid(x):
    # One EUP transcendental (tanh) instead of exp + divide.
    return 0.5 * jnp.tanh(0.5 * x) + 0.5


def mlp_kernel(x_ref, w1_ref, b1_ref, w2_ref, b2_ref, o_ref):
    """One batch block.

    x_ref : (IN_F, ROWS, LANES) VMEM, batch spread over (row, lane)
    w1_ref: (HID_F*IN_F,) SMEM   (flattened torch hidden.weight, row-major)
    b1_ref: (HID_F,)      SMEM
    w2_ref: (HID_F,)      SMEM   (flattened torch output.weight)
    b2_ref: (1,)          SMEM
    o_ref : (ROWS, LANES) VMEM
    """
    xs = [x_ref[k] for k in range(IN_F)]          # four dense (ROWS, LANES) slabs

    y = None
    # Fully unrolled: 10 hidden units x 4 inputs = 40 scalar-broadcast FMAs,
    # 10 hidden sigmoids + 10 FMAs into the single output unit, 1 output sigmoid.
    # All VPU/EUP, no MXU, dense across sublanes and lanes.
    for j in range(HID_F):
        h = w1_ref[j * IN_F] * xs[0]
        for k in range(1, IN_F):
            h = h + w1_ref[j * IN_F + k] * xs[k]
        h = _sigmoid(h + b1_ref[j])               # bias folded as scalar add
        term = w2_ref[j] * h
        y = term if y is None else y + term
    o_ref[...] = _sigmoid(y + b2_ref[0]).astype(o_ref.dtype)


def neural_network_forward(x, w1, b1, w2, b2, *, rows_max=ROWS_MAX):
    """Pallas forward pass matching NeuralNetwork.forward.

    x : (B, 4)   float32
    w1: (10, 4)  float32  (torch hidden.weight layout)
    b1: (10,)    float32  (torch hidden.bias)
    w2: (1, 10)  float32  (torch output.weight layout)
    b2: (1,)     float32  (torch output.bias)
    returns (B, 1) float32
    """
    B = x.shape[0]

    # Batch -> (total_rows, 128); rows per block is a multiple of 8 (dense
    # sublanes), capped at rows_max so blocks stay ~1 MiB and grids stay long.
    total_rows = pl.cdiv(B, LANES)
    rows_per_block = min(rows_max, ((total_rows + 7) // 8) * 8)
    total_rows = pl.cdiv(total_rows, rows_per_block) * rows_per_block
    num_blocks = total_rows // rows_per_block
    b_pad = total_rows * LANES

    # pad + transpose + contiguous reshape (single XLA pass, no .at[].set copy).
    x_pad = jnp.pad(x.astype(jnp.float32), ((0, b_pad - B), (0, 0)))
    x_t = x_pad.T.reshape(IN_F, total_rows, LANES)

    w1_flat = w1.reshape(HID_F * IN_F).astype(jnp.float32)   # 1-D: no SMEM padding
    w2_flat = w2.reshape(HID_F).astype(jnp.float32)

    smem_spec = pl.BlockSpec(memory_space=pltpu.MemorySpace.SMEM)

    y = pl.pallas_call(
        mlp_kernel,
        out_shape=jax.ShapeDtypeStruct((total_rows, LANES), jnp.float32),
        grid=(num_blocks,),
        in_specs=[
            pl.BlockSpec((IN_F, rows_per_block, LANES), lambda i: (0, i, 0)),
            smem_spec,   # w1 (40,)
            smem_spec,   # b1 (10,)
            smem_spec,   # w2 (10,)
            smem_spec,   # b2 (1,)
        ],
        out_specs=pl.BlockSpec((rows_per_block, LANES), lambda i: (i, 0)),
        compiler_params=pltpu.CompilerParams(
            dimension_semantics=("parallel",),
        ),
    )(x_t, w1_flat, b1.astype(jnp.float32), w2_flat, b2.astype(jnp.float32))

    # Back to the PyTorch-facing (B, 1) layout; contiguous reshape, drop padding.
    return y.reshape(b_pad)[:B].reshape(B, OUT_F)


if __name__ == "__main__":
    layer_numbers = [IN_F, HID_F, OUT_F]
    key = jax.random.PRNGKey(0)
    kx, k1, k2, k3, k4 = jax.random.split(key, 5)

    batch = 200  # pads to 8 rows x 128 lanes, single grid step; tail is sliced off

    # Deterministic PyTorch-style init: uniform(-1/sqrt(fan_in), 1/sqrt(fan_in)),
    # parameters kept in torch layouts: hidden.weight (10,4), output.weight (1,10).
    bound1 = 1.0 / jnp.sqrt(float(layer_numbers[0]))
    bound2 = 1.0 / jnp.sqrt(float(layer_numbers[1]))
    w1 = jax.random.uniform(k1, (layer_numbers[1], layer_numbers[0]),
                            jnp.float32, -bound1, bound1)
    b1 = jax.random.uniform(k2, (layer_numbers[1],), jnp.float32, -bound1, bound1)
    w2 = jax.random.uniform(k3, (layer_numbers[2], layer_numbers[1]),
                            jnp.float32, -bound2, bound2)
    b2 = jax.random.uniform(k4, (layer_numbers[2],), jnp.float32, -bound2, bound2)

    x = jax.random.normal(kx, (batch, layer_numbers[0]), jnp.float32)

    out = neural_network_forward(x, w1, b1, w2, b2)
    out = jax.block_until_ready(out)

    # Pure-JAX reference (same math as the PyTorch module).
    ref = jax.nn.sigmoid(jax.nn.sigmoid(x @ w1.T + b1) @ w2.T + b2)
    assert out.shape == (batch, layer_numbers[2]), out.shape
    assert jnp.allclose(out, ref, atol=1e-5, rtol=1e-5), "mismatch vs reference"

    print("KERNEL_OK")
</pallas_src>

<mosaic_0001>
module attributes {stable_mosaic.version = 11 : i64} {
  func.func @mlp_kernel(%arg0: i32, %arg1: memref<4x8x128xf32, #tpu.memory_space<vmem>>, %arg2: memref<40xf32, #tpu.memory_space<smem>>, %arg3: memref<10xf32, #tpu.memory_space<smem>>, %arg4: memref<10xf32, #tpu.memory_space<smem>>, %arg5: memref<1xf32, #tpu.memory_space<smem>>, %arg6: memref<8x128xf32, #tpu.memory_space<vmem>>) attributes {dimension_semantics = [#tpu.dimension_semantics<parallel>], iteration_bounds = array<i64: 1>, scalar_prefetch = 0 : i64, scratch_operands = 0 : i64, tpu.core_type = #tpu.core_type<tc>, window_params = [{transform_indices = @transform_0, window_bounds = array<i64: 4, 8, 128>}, {transform_indices = @transform_1, window_bounds = array<i64: 40>}, {transform_indices = @transform_2, window_bounds = array<i64: 10>}, {transform_indices = @transform_3, window_bounds = array<i64: 10>}, {transform_indices = @transform_4, window_bounds = array<i64: 1>}, {transform_indices = @transform_5, window_bounds = array<i64: 8, 128>}]} {
    %c0 = arith.constant 0 : index
    %c0_0 = arith.constant 0 : index
    %c0_1 = arith.constant 0 : index
    %0 = vector.load %arg1[%c0, %c0_0, %c0_1] : memref<4x8x128xf32, #tpu.memory_space<vmem>>, vector<1x8x128xf32>
    %1 = vector.shape_cast %0 : vector<1x8x128xf32> to vector<8x128xf32>
    %c1 = arith.constant 1 : index
    %c0_2 = arith.constant 0 : index
    %c0_3 = arith.constant 0 : index
    %2 = vector.load %arg1[%c1, %c0_2, %c0_3] : memref<4x8x128xf32, #tpu.memory_space<vmem>>, vector<1x8x128xf32>
    %3 = vector.shape_cast %2 : vector<1x8x128xf32> to vector<8x128xf32>
    %c2 = arith.constant 2 : index
    %c0_4 = arith.constant 0 : index
    %c0_5 = arith.constant 0 : index
    %4 = vector.load %arg1[%c2, %c0_4, %c0_5] : memref<4x8x128xf32, #tpu.memory_space<vmem>>, vector<1x8x128xf32>
    %5 = vector.shape_cast %4 : vector<1x8x128xf32> to vector<8x128xf32>
    %c3 = arith.constant 3 : index
    %c0_6 = arith.constant 0 : index
    %c0_7 = arith.constant 0 : index
    %6 = vector.load %arg1[%c3, %c0_6, %c0_7] : memref<4x8x128xf32, #tpu.memory_space<vmem>>, vector<1x8x128xf32>
    %7 = vector.shape_cast %6 : vector<1x8x128xf32> to vector<8x128xf32>
    %c0_8 = arith.constant 0 : index
    %8 = memref.load %arg2[%c0_8] : memref<40xf32, #tpu.memory_space<smem>>
    %9 = vector.broadcast %8 : f32 to vector<8x128xf32>
    %10 = arith.mulf %9, %1 : vector<8x128xf32>
    %c1_9 = arith.constant 1 : index
    %11 = memref.load %arg2[%c1_9] : memref<40xf32, #tpu.memory_space<smem>>
    %12 = vector.broadcast %11 : f32 to vector<8x128xf32>
    %13 = arith.mulf %12, %3 : vector<8x128xf32>
    %14 = arith.addf %10, %13 : vector<8x128xf32>
    %c2_10 = arith.constant 2 : index
    %15 = memref.load %arg2[%c2_10] : memref<40xf32, #tpu.memory_space<smem>>
    %16 = vector.broadcast %15 : f32 to vector<8x128xf32>
    %17 = arith.mulf %16, %5 : vector<8x128xf32>
    %18 = arith.addf %14, %17 : vector<8x128xf32>
    %c3_11 = arith.constant 3 : index
    %19 = memref.load %arg2[%c3_11] : memref<40xf32, #tpu.memory_space<smem>>
    %20 = vector.broadcast %19 : f32 to vector<8x128xf32>
    %21 = arith.mulf %20, %7 : vector<8x128xf32>
    %22 = arith.addf %18, %21 : vector<8x128xf32>
    %c0_12 = arith.constant 0 : index
    %23 = memref.load %arg3[%c0_12] : memref<10xf32, #tpu.memory_space<smem>>
    %24 = vector.broadcast %23 : f32 to vector<8x128xf32>
    %25 = arith.addf %22, %24 : vector<8x128xf32>
    %cst = arith.constant 5.000000e-01 : f32
    %26 = vector.broadcast %cst : f32 to vector<8x128xf32>
    %27 = arith.mulf %26, %25 : vector<8x128xf32>
    %28 = math.tanh %27 : vector<8x128xf32>
    %cst_13 = arith.constant 5.000000e-01 : f32
    %29 = vector.broadcast %cst_13 : f32 to vector<8x128xf32>
    %30 = arith.mulf %29, %28 : vector<8x128xf32>
    %cst_14 = arith.constant 5.000000e-01 : f32
    %31 = vector.broadcast %cst_14 : f32 to vector<8x128xf32>
    %32 = arith.addf %30, %31 : vector<8x128xf32>
    %c0_15 = arith.constant 0 : index
    %33 = memref.load %arg4[%c0_15] : memref<10xf32, #tpu.memory_space<smem>>
    %34 = vector.broadcast %33 : f32 to vector<8x128xf32>
    %35 = arith.mulf %34, %32 : vector<8x128xf32>
    %c4 = arith.constant 4 : index
    %36 = memref.load %arg2[%c4] : memref<40xf32, #tpu.memory_space<smem>>
    %37 = vector.broadcast %36 : f32 to vector<8x128xf32>
    %38 = arith.mulf %37, %1 : vector<8x128xf32>
    %c5 = arith.constant 5 : index
    %39 = memref.load %arg2[%c5] : memref<40xf32, #tpu.memory_space<smem>>
    %40 = vector.broadcast %39 : f32 to vector<8x128xf32>
    %41 = arith.mulf %40, %3 : vector<8x128xf32>
    %42 = arith.addf %38, %41 : vector<8x128xf32>
    %c6 = arith.constant 6 : index
    %43 = memref.load %arg2[%c6] : memref<40xf32, #tpu.memory_space<smem>>
    %44 = vector.broadcast %43 : f32 to vector<8x128xf32>
    %45 = arith.mulf %44, %5 : vector<8x128xf32>
    %46 = arith.addf %42, %45 : vector<8x128xf32>
    %c7 = arith.constant 7 : index
    %47 = memref.load %arg2[%c7] : memref<40xf32, #tpu.memory_space<smem>>
    %48 = vector.broadcast %47 : f32 to vector<8x128xf32>
    %49 = arith.mulf %48, %7 : vector<8x128xf32>
    %50 = arith.addf %46, %49 : vector<8x128xf32>
    %c1_16 = arith.constant 1 : index
    %51 = memref.load %arg3[%c1_16] : memref<10xf32, #tpu.memory_space<smem>>
    %52 = vector.broadcast %51 : f32 to vector<8x128xf32>
    %53 = arith.addf %50, %52 : vector<8x128xf32>
    %cst_17 = arith.constant 5.000000e-01 : f32
    %54 = vector.broadcast %cst_17 : f32 to vector<8x128xf32>
    %55 = arith.mulf %54, %53 : vector<8x128xf32>
    %56 = math.tanh %55 : vector<8x128xf32>
    %cst_18 = arith.constant 5.000000e-01 : f32
    %57 = vector.broadcast %cst_18 : f32 to vector<8x128xf32>
    %58 = arith.mulf %57, %56 : vector<8x128xf32>
    %cst_19 = arith.constant 5.000000e-01 : f32
    %59 = vector.broadcast %cst_19 : f32 to vector<8x128xf32>
    %60 = arith.addf %58, %59 : vector<8x128xf32>
    %c1_20 = arith.constant 1 : index
    %61 = memref.load %arg4[%c1_20] : memref<10xf32, #tpu.memory_space<smem>>
    %62 = vector.broadcast %61 : f32 to vector<8x128xf32>
    %63 = arith.mulf %62, %60 : vector<8x128xf32>
    %64 = arith.addf %35, %63 : vector<8x128xf32>
    %c8 = arith.constant 8 : index
    %65 = memref.load %arg2[%c8] : memref<40xf32, #tpu.memory_space<smem>>
    %66 = vector.broadcast %65 : f32 to vector<8x128xf32>
    %67 = arith.mulf %66, %1 : vector<8x128xf32>
    %c9 = arith.constant 9 : index
    %68 = memref.load %arg2[%c9] : memref<40xf32, #tpu.memory_space<smem>>
    %69 = vector.broadcast %68 : f32 to vector<8x128xf32>
    %70 = arith.mulf %69, %3 : vector<8x128xf32>
    %71 = arith.addf %67, %70 : vector<8x128xf32>
    %c10 = arith.constant 10 : index
    %72 = memref.load %arg2[%c10] : memref<40xf32, #tpu.memory_space<smem>>
    %73 = vector.broadcast %72 : f32 to vector<8x128xf32>
    %74 = arith.mulf %73, %5 : vector<8x128xf32>
    %75 = arith.addf %71, %74 : vector<8x128xf32>
    %c11 = arith.constant 11 : index
    %76 = memref.load %arg2[%c11] : memref<40xf32, #tpu.memory_space<smem>>
    %77 = vector.broadcast %76 : f32 to vector<8x128xf32>
    %78 = arith.mulf %77, %7 : vector<8x128xf32>
    %79 = arith.addf %75, %78 : vector<8x128xf32>
    %c2_21 = arith.constant 2 : index
    %80 = memref.load %arg3[%c2_21] : memref<10xf32, #tpu.memory_space<smem>>
    %81 = vector.broadcast %80 : f32 to vector<8x128xf32>
    %82 = arith.addf %79, %81 : vector<8x128xf32>
    %cst_22 = arith.constant 5.000000e-01 : f32
    %83 = vector.broadcast %cst_22 : f32 to vector<8x128xf32>
    %84 = arith.mulf %83, %82 : vector<8x128xf32>
    %85 = math.tanh %84 : vector<8x128xf32>
    %cst_23 = arith.constant 5.000000e-01 : f32
    %86 = vector.broadcast %cst_23 : f32 to vector<8x128xf32>
    %87 = arith.mulf %86, %85 : vector<8x128xf32>
    %cst_24 = arith.constant 5.000000e-01 : f32
    %88 = vector.broadcast %cst_24 : f32 to vector<8x128xf32>
    %89 = arith.addf %87, %88 : vector<8x128xf32>
    %c2_25 = arith.constant 2 : index
    %90 = memref.load %arg4[%c2_25] : memref<10xf32, #tpu.memory_space<smem>>
    %91 = vector.broadcast %90 : f32 to vector<8x128xf32>
    %92 = arith.mulf %91, %89 : vector<8x128xf32>
    %93 = arith.addf %64, %92 : vector<8x128xf32>
    %c12 = arith.constant 12 : index
    %94 = memref.load %arg2[%c12] : memref<40xf32, #tpu.memory_space<smem>>
    %95 = vector.broadcast %94 : f32 to vector<8x128xf32>
    %96 = arith.mulf %95, %1 : vector<8x128xf32>
    %c13 = arith.constant 13 : index
    %97 = memref.load %arg2[%c13] : memref<40xf32, #tpu.memory_space<smem>>
    %98 = vector.broadcast %97 : f32 to vector<8x128xf32>
    %99 = arith.mulf %98, %3 : vector<8x128xf32>
    %100 = arith.addf %96, %99 : vector<8x128xf32>
    %c14 = arith.constant 14 : index
    %101 = memref.load %arg2[%c14] : memref<40xf32, #tpu.memory_space<smem>>
    %102 = vector.broadcast %101 : f32 to vector<8x128xf32>
    %103 = arith.mulf %102, %5 : vector<8x128xf32>
    %104 = arith.addf %100, %103 : vector<8x128xf32>
    %c15 = arith.constant 15 : index
    %105 = memref.load %arg2[%c15] : memref<40xf32, #tpu.memory_space<smem>>
    %106 = vector.broadcast %105 : f32 to vector<8x128xf32>
    %107 = arith.mulf %106, %7 : vector<8x128xf32>
    %108 = arith.addf %104, %107 : vector<8x128xf32>
    %c3_26 = arith.constant 3 : index
    %109 = memref.load %arg3[%c3_26] : memref<10xf32, #tpu.memory_space<smem>>
    %110 = vector.broadcast %109 : f32 to vector<8x128xf32>
    %111 = arith.addf %108, %110 : vector<8x128xf32>
    %cst_27 = arith.constant 5.000000e-01 : f32
    %112 = vector.broadcast %cst_27 : f32 to vector<8x128xf32>
    %113 = arith.mulf %112, %111 : vector<8x128xf32>
    %114 = math.tanh %113 : vector<8x128xf32>
    %cst_28 = arith.constant 5.000000e-01 : f32
    %115 = vector.broadcast %cst_28 : f32 to vector<8x128xf32>
    %116 = arith.mulf %115, %114 : vector<8x128xf32>
    %cst_29 = arith.constant 5.000000e-01 : f32
    %117 = vector.broadcast %cst_29 : f32 to vector<8x128xf32>
    %118 = arith.addf %116, %117 : vector<8x128xf32>
    %c3_30 = arith.constant 3 : index
    %119 = memref.load %arg4[%c3_30] : memref<10xf32, #tpu.memory_space<smem>>
    %120 = vector.broadcast %119 : f32 to vector<8x128xf32>
    %121 = arith.mulf %120, %118 : vector<8x128xf32>
    %122 = arith.addf %93, %121 : vector<8x128xf32>
    %c16 = arith.constant 16 : index
    %123 = memref.load %arg2[%c16] : memref<40xf32, #tpu.memory_space<smem>>
    %124 = vector.broadcast %123 : f32 to vector<8x128xf32>
    %125 = arith.mulf %124, %1 : vector<8x128xf32>
    %c17 = arith.constant 17 : index
    %126 = memref.load %arg2[%c17] : memref<40xf32, #tpu.memory_space<smem>>
    %127 = vector.broadcast %126 : f32 to vector<8x128xf32>
    %128 = arith.mulf %127, %3 : vector<8x128xf32>
    %129 = arith.addf %125, %128 : vector<8x128xf32>
    %c18 = arith.constant 18 : index
    %130 = memref.load %arg2[%c18] : memref<40xf32, #tpu.memory_space<smem>>
    %131 = vector.broadcast %130 : f32 to vector<8x128xf32>
    %132 = arith.mulf %131, %5 : vector<8x128xf32>
    %133 = arith.addf %129, %132 : vector<8x128xf32>
    %c19 = arith.constant 19 : index
    %134 = memref.load %arg2[%c19] : memref<40xf32, #tpu.memory_space<smem>>
    %135 = vector.broadcast %134 : f32 to vector<8x128xf32>
    %136 = arith.mulf %135, %7 : vector<8x128xf32>
    %137 = arith.addf %133, %136 : vector<8x128xf32>
    %c4_31 = arith.constant 4 : index
    %138 = memref.load %arg3[%c4_31] : memref<10xf32, #tpu.memory_space<smem>>
    %139 = vector.broadcast %138 : f32 to vector<8x128xf32>
    %140 = arith.addf %137, %139 : vector<8x128xf32>
    %cst_32 = arith.constant 5.000000e-01 : f32
    %141 = vector.broadcast %cst_32 : f32 to vector<8x128xf32>
    %142 = arith.mulf %141, %140 : vector<8x128xf32>
    %143 = math.tanh %142 : vector<8x128xf32>
    %cst_33 = arith.constant 5.000000e-01 : f32
    %144 = vector.broadcast %cst_33 : f32 to vector<8x128xf32>
    %145 = arith.mulf %144, %143 : vector<8x128xf32>
    %cst_34 = arith.constant 5.000000e-01 : f32
    %146 = vector.broadcast %cst_34 : f32 to vector<8x128xf32>
    %147 = arith.addf %145, %146 : vector<8x128xf32>
    %c4_35 = arith.constant 4 : index
    %148 = memref.load %arg4[%c4_35] : memref<10xf32, #tpu.memory_space<smem>>
    %149 = vector.broadcast %148 : f32 to vector<8x128xf32>
    %150 = arith.mulf %149, %147 : vector<8x128xf32>
    %151 = arith.addf %122, %150 : vector<8x128xf32>
    %c20 = arith.constant 20 : index
    %152 = memref.load %arg2[%c20] : memref<40xf32, #tpu.memory_space<smem>>
    %153 = vector.broadcast %152 : f32 to vector<8x128xf32>
    %154 = arith.mulf %153, %1 : vector<8x128xf32>
    %c21 = arith.constant 21 : index
    %155 = memref.load %arg2[%c21] : memref<40xf32, #tpu.memory_space<smem>>
    %156 = vector.broadcast %155 : f32 to vector<8x128xf32>
    %157 = arith.mulf %156, %3 : vector<8x128xf32>
    %158 = arith.addf %154, %157 : vector<8x128xf32>
    %c22 = arith.constant 22 : index
    %159 = memref.load %arg2[%c22] : memref<40xf32, #tpu.memory_space<smem>>
    %160 = vector.broadcast %159 : f32 to vector<8x128xf32>
    %161 = arith.mulf %160, %5 : vector<8x128xf32>
    %162 = arith.addf %158, %161 : vector<8x128xf32>
    %c23 = arith.constant 23 : index
    %163 = memref.load %arg2[%c23] : memref<40xf32, #tpu.memory_space<smem>>
    %164 = vector.broadcast %163 : f32 to vector<8x128xf32>
    %165 = arith.mulf %164, %7 : vector<8x128xf32>
    %166 = arith.addf %162, %165 : vector<8x128xf32>
    %c5_36 = arith.constant 5 : index
    %167 = memref.load %arg3[%c5_36] : memref<10xf32, #tpu.memory_space<smem>>
    %168 = vector.broadcast %167 : f32 to vector<8x128xf32>
    %169 = arith.addf %166, %168 : vector<8x128xf32>
    %cst_37 = arith.constant 5.000000e-01 : f32
    %170 = vector.broadcast %cst_37 : f32 to vector<8x128xf32>
    %171 = arith.mulf %170, %169 : vector<8x128xf32>
    %172 = math.tanh %171 : vector<8x128xf32>
    %cst_38 = arith.constant 5.000000e-01 : f32
    %173 = vector.broadcast %cst_38 : f32 to vector<8x128xf32>
    %174 = arith.mulf %173, %172 : vector<8x128xf32>
    %cst_39 = arith.constant 5.000000e-01 : f32
    %175 = vector.broadcast %cst_39 : f32 to vector<8x128xf32>
    %176 = arith.addf %174, %175 : vector<8x128xf32>
    %c5_40 = arith.constant 5 : index
    %177 = memref.load %arg4[%c5_40] : memref<10xf32, #tpu.memory_space<smem>>
    %178 = vector.broadcast %177 : f32 to vector<8x128xf32>
    %179 = arith.mulf %178, %176 : vector<8x128xf32>
    %180 = arith.addf %151, %179 : vector<8x128xf32>
    %c24 = arith.constant 24 : index
    %181 = memref.load %arg2[%c24] : memref<40xf32, #tpu.memory_space<smem>>
    %182 = vector.broadcast %181 : f32 to vector<8x128xf32>
    %183 = arith.mulf %182, %1 : vector<8x128xf32>
    %c25 = arith.constant 25 : index
    %184 = memref.load %arg2[%c25] : memref<40xf32, #tpu.memory_space<smem>>
    %185 = vector.broadcast %184 : f32 to vector<8x128xf32>
    %186 = arith.mulf %185, %3 : vector<8x128xf32>
    %187 = arith.addf %183, %186 : vector<8x128xf32>
    %c26 = arith.constant 26 : index
    %188 = memref.load %arg2[%c26] : memref<40xf32, #tpu.memory_space<smem>>
    %189 = vector.broadcast %188 : f32 to vector<8x128xf32>
    %190 = arith.mulf %189, %5 : vector<8x128xf32>
    %191 = arith.addf %187, %190 : vector<8x128xf32>
    %c27 = arith.constant 27 : index
    %192 = memref.load %arg2[%c27] : memref<40xf32, #tpu.memory_space<smem>>
    %193 = vector.broadcast %192 : f32 to vector<8x128xf32>
    %194 = arith.mulf %193, %7 : vector<8x128xf32>
    %195 = arith.addf %191, %194 : vector<8x128xf32>
    %c6_41 = arith.constant 6 : index
    %196 = memref.load %arg3[%c6_41] : memref<10xf32, #tpu.memory_space<smem>>
    %197 = vector.broadcast %196 : f32 to vector<8x128xf32>
    %198 = arith.addf %195, %197 : vector<8x128xf32>
    %cst_42 = arith.constant 5.000000e-01 : f32
    %199 = vector.broadcast %cst_42 : f32 to vector<8x128xf32>
    %200 = arith.mulf %199, %198 : vector<8x128xf32>
    %201 = math.tanh %200 : vector<8x128xf32>
    %cst_43 = arith.constant 5.000000e-01 : f32
    %202 = vector.broadcast %cst_43 : f32 to vector<8x128xf32>
    %203 = arith.mulf %202, %201 : vector<8x128xf32>
    %cst_44 = arith.constant 5.000000e-01 : f32
    %204 = vector.broadcast %cst_44 : f32 to vector<8x128xf32>
    %205 = arith.addf %203, %204 : vector<8x128xf32>
    %c6_45 = arith.constant 6 : index
    %206 = memref.load %arg4[%c6_45] : memref<10xf32, #tpu.memory_space<smem>>
    %207 = vector.broadcast %206 : f32 to vector<8x128xf32>
    %208 = arith.mulf %207, %205 : vector<8x128xf32>
    %209 = arith.addf %180, %208 : vector<8x128xf32>
    %c28 = arith.constant 28 : index
    %210 = memref.load %arg2[%c28] : memref<40xf32, #tpu.memory_space<smem>>
    %211 = vector.broadcast %210 : f32 to vector<8x128xf32>
    %212 = arith.mulf %211, %1 : vector<8x128xf32>
    %c29 = arith.constant 29 : index
    %213 = memref.load %arg2[%c29] : memref<40xf32, #tpu.memory_space<smem>>
    %214 = vector.broadcast %213 : f32 to vector<8x128xf32>
    %215 = arith.mulf %214, %3 : vector<8x128xf32>
    %216 = arith.addf %212, %215 : vector<8x128xf32>
    %c30 = arith.constant 30 : index
    %217 = memref.load %arg2[%c30] : memref<40xf32, #tpu.memory_space<smem>>
    %218 = vector.broadcast %217 : f32 to vector<8x128xf32>
    %219 = arith.mulf %218, %5 : vector<8x128xf32>
    %220 = arith.addf %216, %219 : vector<8x128xf32>
    %c31 = arith.constant 31 : index
    %221 = memref.load %arg2[%c31] : memref<40xf32, #tpu.memory_space<smem>>
    %222 = vector.broadcast %221 : f32 to vector<8x128xf32>
    %223 = arith.mulf %222, %7 : vector<8x128xf32>
    %224 = arith.addf %220, %223 : vector<8x128xf32>
    %c7_46 = arith.constant 7 : index
    %225 = memref.load %arg3[%c7_46] : memref<10xf32, #tpu.memory_space<smem>>
    %226 = vector.broadcast %225 : f32 to vector<8x128xf32>
    %227 = arith.addf %224, %226 : vector<8x128xf32>
    %cst_47 = arith.constant 5.000000e-01 : f32
    %228 = vector.broadcast %cst_47 : f32 to vector<8x128xf32>
    %229 = arith.mulf %228, %227 : vector<8x128xf32>
    %230 = math.tanh %229 : vector<8x128xf32>
    %cst_48 = arith.constant 5.000000e-01 : f32
    %231 = vector.broadcast %cst_48 : f32 to vector<8x128xf32>
    %232 = arith.mulf %231, %230 : vector<8x128xf32>
    %cst_49 = arith.constant 5.000000e-01 : f32
    %233 = vector.broadcast %cst_49 : f32 to vector<8x128xf32>
    %234 = arith.addf %232, %233 : vector<8x128xf32>
    %c7_50 = arith.constant 7 : index
    %235 = memref.load %arg4[%c7_50] : memref<10xf32, #tpu.memory_space<smem>>
    %236 = vector.broadcast %235 : f32 to vector<8x128xf32>
    %237 = arith.mulf %236, %234 : vector<8x128xf32>
    %238 = arith.addf %209, %237 : vector<8x128xf32>
    %c32 = arith.constant 32 : index
    %239 = memref.load %arg2[%c32] : memref<40xf32, #tpu.memory_space<smem>>
    %240 = vector.broadcast %239 : f32 to vector<8x128xf32>
    %241 = arith.mulf %240, %1 : vector<8x128xf32>
    %c33 = arith.constant 33 : index
    %242 = memref.load %arg2[%c33] : memref<40xf32, #tpu.memory_space<smem>>
    %243 = vector.broadcast %242 : f32 to vector<8x128xf32>
    %244 = arith.mulf %243, %3 : vector<8x128xf32>
    %245 = arith.addf %241, %244 : vector<8x128xf32>
    %c34 = arith.constant 34 : index
    %246 = memref.load %arg2[%c34] : memref<40xf32, #tpu.memory_space<smem>>
    %247 = vector.broadcast %246 : f32 to vector<8x128xf32>
    %248 = arith.mulf %247, %5 : vector<8x128xf32>
    %249 = arith.addf %245, %248 : vector<8x128xf32>
    %c35 = arith.constant 35 : index
    %250 = memref.load %arg2[%c35] : memref<40xf32, #tpu.memory_space<smem>>
    %251 = vector.broadcast %250 : f32 to vector<8x128xf32>
    %252 = arith.mulf %251, %7 : vector<8x128xf32>
    %253 = arith.addf %249, %252 : vector<8x128xf32>
    %c8_51 = arith.constant 8 : index
    %254 = memref.load %arg3[%c8_51] : memref<10xf32, #tpu.memory_space<smem>>
    %255 = vector.broadcast %254 : f32 to vector<8x128xf32>
    %256 = arith.addf %253, %255 : vector<8x128xf32>
    %cst_52 = arith.constant 5.000000e-01 : f32
    %257 = vector.broadcast %cst_52 : f32 to vector<8x128xf32>
    %258 = arith.mulf %257, %256 : vector<8x128xf32>
    %259 = math.tanh %258 : vector<8x128xf32>
    %cst_53 = arith.constant 5.000000e-01 : f32
    %260 = vector.broadcast %cst_53 : f32 to vector<8x128xf32>
    %261 = arith.mulf %260, %259 : vector<8x128xf32>
    %cst_54 = arith.constant 5.000000e-01 : f32
    %262 = vector.broadcast %cst_54 : f32 to vector<8x128xf32>
    %263 = arith.addf %261, %262 : vector<8x128xf32>
    %c8_55 = arith.constant 8 : index
    %264 = memref.load %arg4[%c8_55] : memref<10xf32, #tpu.memory_space<smem>>
    %265 = vector.broadcast %264 : f32 to vector<8x128xf32>
    %266 = arith.mulf %265, %263 : vector<8x128xf32>
    %267 = arith.addf %238, %266 : vector<8x128xf32>
    %c36 = arith.constant 36 : index
    %268 = memref.load %arg2[%c36] : memref<40xf32, #tpu.memory_space<smem>>
    %269 = vector.broadcast %268 : f32 to vector<8x128xf32>
    %270 = arith.mulf %269, %1 : vector<8x128xf32>
    %c37 = arith.constant 37 : index
    %271 = memref.load %arg2[%c37] : memref<40xf32, #tpu.memory_space<smem>>
    %272 = vector.broadcast %271 : f32 to vector<8x128xf32>
    %273 = arith.mulf %272, %3 : vector<8x128xf32>
    %274 = arith.addf %270, %273 : vector<8x128xf32>
    %c38 = arith.constant 38 : index
    %275 = memref.load %arg2[%c38] : memref<40xf32, #tpu.memory_space<smem>>
    %276 = vector.broadcast %275 : f32 to vector<8x128xf32>
    %277 = arith.mulf %276, %5 : vector<8x128xf32>
    %278 = arith.addf %274, %277 : vector<8x128xf32>
    %c39 = arith.constant 39 : index
    %279 = memref.load %arg2[%c39] : memref<40xf32, #tpu.memory_space<smem>>
    %280 = vector.broadcast %279 : f32 to vector<8x128xf32>
    %281 = arith.mulf %280, %7 : vector<8x128xf32>
    %282 = arith.addf %278, %281 : vector<8x128xf32>
    %c9_56 = arith.constant 9 : index
    %283 = memref.load %arg3[%c9_56] : memref<10xf32, #tpu.memory_space<smem>>
    %284 = vector.broadcast %283 : f32 to vector<8x128xf32>
    %285 = arith.addf %282, %284 : vector<8x128xf32>
    %cst_57 = arith.constant 5.000000e-01 : f32
    %286 = vector.broadcast %cst_57 : f32 to vector<8x128xf32>
    %287 = arith.mulf %286, %285 : vector<8x128xf32>
    %288 = math.tanh %287 : vector<8x128xf32>
    %cst_58 = arith.constant 5.000000e-01 : f32
    %289 = vector.broadcast %cst_58 : f32 to vector<8x128xf32>
    %290 = arith.mulf %289, %288 : vector<8x128xf32>
    %cst_59 = arith.constant 5.000000e-01 : f32
    %291 = vector.broadcast %cst_59 : f32 to vector<8x128xf32>
    %292 = arith.addf %290, %291 : vector<8x128xf32>
    %c9_60 = arith.constant 9 : index
    %293 = memref.load %arg4[%c9_60] : memref<10xf32, #tpu.memory_space<smem>>
    %294 = vector.broadcast %293 : f32 to vector<8x128xf32>
    %295 = arith.mulf %294, %292 : vector<8x128xf32>
    %296 = arith.addf %267, %295 : vector<8x128xf32>
    %c0_61 = arith.constant 0 : index
    %297 = memref.load %arg5[%c0_61] : memref<1xf32, #tpu.memory_space<smem>>
    %298 = vector.broadcast %297 : f32 to vector<8x128xf32>
    %299 = arith.addf %296, %298 : vector<8x128xf32>
    %cst_62 = arith.constant 5.000000e-01 : f32
    %300 = vector.broadcast %cst_62 : f32 to vector<8x128xf32>
    %301 = arith.mulf %300, %299 : vector<8x128xf32>
    %302 = math.tanh %301 : vector<8x128xf32>
    %cst_63 = arith.constant 5.000000e-01 : f32
    %303 = vector.broadcast %cst_63 : f32 to vector<8x128xf32>
    %304 = arith.mulf %303, %302 : vector<8x128xf32>
    %cst_64 = arith.constant 5.000000e-01 : f32
    %305 = vector.broadcast %cst_64 : f32 to vector<8x128xf32>
    %306 = arith.addf %304, %305 : vector<8x128xf32>
    %c0_65 = arith.constant 0 : index
    %c0_66 = arith.constant 0 : index
    %307 = vector.load %arg6[%c0_65, %c0_66] : memref<8x128xf32, #tpu.memory_space<vmem>>, vector<8x128xf32>
    tpu.vector_store %arg6[%c0_65, %c0_66], %306 {strides = array<i32>} : memref<8x128xf32, #tpu.memory_space<vmem>>, vector<8x128xf32>,
    return
  }
  func.func @transform_0(%arg0: i32) -> (i32, i32, i32) {
    %c0_i32 = arith.constant 0 : i32
    %c0_i32_0 = arith.constant 0 : i32
    %c0_i32_1 = arith.constant 0 : i32
    return %c0_i32, %arg0, %c0_i32_0 : i32, i32, i32
  }
  func.func @transform_1(%arg0: i32) -> i32 {
    %c0_i32 = arith.constant 0 : i32
    %c0_i32_0 = arith.constant 0 : i32
    return %c0_i32 : i32
  }
  func.func @transform_2(%arg0: i32) -> i32 {
    %c0_i32 = arith.constant 0 : i32
    %c0_i32_0 = arith.constant 0 : i32
    return %c0_i32 : i32
  }
  func.func @transform_3(%arg0: i32) -> i32 {
    %c0_i32 = arith.constant 0 : i32
    %c0_i32_0 = arith.constant 0 : i32
    return %c0_i32 : i32
  }
  func.func @transform_4(%arg0: i32) -> i32 {
    %c0_i32 = arith.constant 0 : i32
    %c0_i32_0 = arith.constant 0 : i32
    return %c0_i32 : i32
  }
  func.func @transform_5(%arg0: i32) -> (i32, i32) {
    %c0_i32 = arith.constant 0 : i32
    %c0_i32_0 = arith.constant 0 : i32
    return %arg0, %c0_i32 : i32, i32
  }
}

</mosaic_0001>

<llo_original>
// kernel: tpu_custom_call.1
$region0: #{tpu_custom_call.1}
  #allocation0 [shape = 'u32[]', space=smem, size = 0x4, offset = 0x4, fixed_abs, tag = 'smem constant byte address 0x4 - core index']
  #allocation1 [shape = 'u32[144,128]{1,0:T(1,128)}', space=vmem, size = 0x12000, scoped, tag = 'internal scratch']
  #allocation2 [shape = 'f32[1]{0:T(128)S(6)}', space=smem, size = 0x200, scoped, tag = 'scoped memory for tpu_custom_call.1']
  %s0 = inlined_call_operand.hbm [shape: f32[4,8,128], index: 0, kind: input, shape index: {}]
  %s1 = inlined_call_operand.vmem [shape: f32[40], index: 1, kind: input, shape index: {}]
  %s2 = inlined_call_operand.vmem [shape: f32[10], index: 2, kind: input, shape index: {}]
  %s3 = inlined_call_operand.vmem [shape: f32[10], index: 3, kind: input, shape index: {}]
  %s4 = inlined_call_operand.<no memory space> [shape: f32[1], index: 4, kind: input, shape index: {}]
  %s5 = inlined_call_operand.hbm [shape: f32[8,128], index: 5, kind: output, shape index: {}]
  %s6 = sld [smem:[#allocation0]]
  $region46: #{tpu_custom_call.1} parent=0
    _
  %s8 = ssub.s32 1, %s6
  %s9 = scalar_select 0, %s8, %s6
  %10 = sst [smem:[#allocation2]] %s4
  $region1: #{tpu_custom_call.1} parent=0
    #allocation3 [shape = 'u8[16384]{0}', space=vmem, size = 0x4000, scoped, tag = 'input window, operand 0, single buffered']
    #allocation4 [shape = 's32[1]{0}', space=sflag, size = 0x4, scoped, tag = 'scoped memory for tpu_custom_call.1']
    #allocation5 [shape = 's32[1]{0}', space=sflag, size = 0x4, scoped, tag = 'scoped memory for tpu_custom_call.1']
    #allocation6 [shape = 's32[1]{0}', space=sflag, size = 0x4, scoped, tag = 'scoped memory for tpu_custom_call.1']
    #allocation7 [shape = 'u8[512]{0}', space=smem, size = 0x200, scoped, tag = 'input window, operand 1, single buffered']
    #allocation8 [shape = 'u8[512]{0}', space=smem, size = 0x200, scoped, tag = 'input window, operand 2, single buffered']
    #allocation9 [shape = 's32[1]{0}', space=sflag, size = 0x4, scoped, tag = 'scoped memory for tpu_custom_call.1']
    #allocation10 [shape = 'u8[512]{0}', space=smem, size = 0x200, scoped, tag = 'input window, operand 3, single buffered']
    #allocation11 [shape = 'u8[4096]{0}', space=vmem, size = 0x1000, scoped, tag = 'output window, operand 0, single buffered']
    %11 = vsyncpa [#allocation4], 0
    %12 = vsyncpa [#allocation6], 0
    %13 = vsyncpa [#allocation9], 0
    %14 = vsyncpa [#allocation5], 0
    // Predicated region
    $region2: #{tpu_custom_call.1} parent=1 // pred_check
      _
    $region3: #{tpu_custom_call.1} parent=1 // pred_check_branch
      %16 = sbr.rel (0) target = $region5
    $region4: #{tpu_custom_call.1} parent=1 // pred_region
      %s18 = ssub.s32 512, 512
      %19 = vsyncadd [#allocation4], %s18
      %s20 = sshll.u32 [#allocation3], 4
      %s21 = int_to_ptr.vmem [resolvable:$true] %s20
      %26 = dma.hbm_to_vmem [thread:$0]  %s0, 512, %s21, [#allocation4], 128, 128, 8
    $region5: #{tpu_custom_call.1} parent=1 // pred_fallthru
      _
    // Predicated region
    $region6: #{tpu_custom_call.1} parent=1 // pred_check
      _
    $region7: #{tpu_custom_call.1} parent=1 // pred_check_branch
      %28 = sbr.rel (0) target = $region9
    $region8: #{tpu_custom_call.1} parent=1 // pred_region
      %s30 = ssub.s32 16, 16
      %31 = vsyncadd [#allocation6], %s30
      %s33 = sshll.u32 %s1, 4
      %s34 = int_to_ptr.vmem [resolvable:$true] %s33
      %36 = dma.vmem_to_smem %s34, 16, [#allocation7], [#allocation6]
    $region9: #{tpu_custom_call.1} parent=1 // pred_fallthru
      _
    // Predicated region
    $region10: #{tpu_custom_call.1} parent=1 // pred_check
      _
    $region11: #{tpu_custom_call.1} parent=1 // pred_check_branch
      %38 = sbr.rel (0) target = $region13
    $region12: #{tpu_custom_call.1} parent=1 // pred_region
      %s40 = ssub.s32 16, 16
      %41 = vsyncadd [#allocation9], %s40
      %s43 = sshll.u32 %s2, 4
      %s44 = int_to_ptr.vmem [resolvable:$true] %s43
      %46 = dma.vmem_to_smem %s44, 16, [#allocation8], [#allocation9]
    $region13: #{tpu_custom_call.1} parent=1 // pred_fallthru
      _
    // Predicated region
    $region14: #{tpu_custom_call.1} parent=1 // pred_check
      _
    $region15: #{tpu_custom_call.1} parent=1 // pred_check_branch
      %48 = sbr.rel (0) target = $region17
    $region16: #{tpu_custom_call.1} parent=1 // pred_region
      %s50 = ssub.s32 16, 16
      %51 = vsyncadd [#allocation9], %s50
      %s53 = sshll.u32 %s3, 4
      %s54 = int_to_ptr.vmem [resolvable:$true] %s53
      %56 = dma.vmem_to_smem %s54, 16, [#allocation10], [#allocation9]
    $region17: #{tpu_custom_call.1} parent=1 // pred_fallthru
      _
    // Predicated region
    $region18: #{tpu_custom_call.1} parent=1 // pred_check
      _
    $region19: #{tpu_custom_call.1} parent=1 // pred_check_branch
      %58 = sbr.rel (0) target = $region21
    $region20: #{tpu_custom_call.1} parent=1 // pred_region
      _
    $region21: #{tpu_custom_call.1} parent=1 // pred_fallthru
      _
    // Predicated region
    $region22: #{tpu_custom_call.1} parent=1 // pred_check
      _
    $region23: #{tpu_custom_call.1} parent=1 // pred_check_branch
      %60 = sbr.rel (0) target = $region25
    $region24: #{tpu_custom_call.1} parent=1 // pred_region
      %61 = dma.done [#allocation4], 512
    $region25: #{tpu_custom_call.1} parent=1 // pred_fallthru
      _
    // Predicated region
    $region26: #{tpu_custom_call.1} parent=1 // pred_check
      _
    $region27: #{tpu_custom_call.1} parent=1 // pred_check_branch
      %63 = sbr.rel (0) target = $region29
    $region28: #{tpu_custom_call.1} parent=1 // pred_region
      %64 = dma.done [#allocation6], 16
    $region29: #{tpu_custom_call.1} parent=1 // pred_fallthru
      _
    // Predicated region
    $region30: #{tpu_custom_call.1} parent=1 // pred_check
      _
    $region31: #{tpu_custom_call.1} parent=1 // pred_check_branch
      %66 = sbr.rel (0) target = $region33
    $region32: #{tpu_custom_call.1} parent=1 // pred_region
      %67 = dma.done [#allocation9], 16
    $region33: #{tpu_custom_call.1} parent=1 // pred_fallthru
      _
    // Predicated region
    $region34: #{tpu_custom_call.1} parent=1 // pred_check
      _
    $region35: #{tpu_custom_call.1} parent=1 // pred_check_branch
      %69 = sbr.rel (0) target = $region37
    $region36: #{tpu_custom_call.1} parent=1 // pred_region
      %70 = dma.done [#allocation9], 16
    $region37: #{tpu_custom_call.1} parent=1 // pred_fallthru
      _
    %71 = sfence
    %v72 = vld [vmem:[#allocation3] sm:$0xff]
    %s73 = scalar_lea.vmem [#allocation3], 8
    %v74 = vld [vmem:[%s73] sm:$0xff]
    %s75 = scalar_lea.vmem [#allocation3], 16
    %v76 = vld [vmem:[%s75] sm:$0xff]
    %s77 = scalar_lea.vmem [#allocation3], 24
    %v78 = vld [vmem:[%s77] sm:$0xff]
    %s79 = sld [smem:[#allocation7]]
    %v80 = vstv %s79
    %v81 = vmul.f32 %v80, %v72
    %s82 = sld [smem:[#allocation7 + $0x1]]
    %v83 = vstv %s82
    %v84 = vmul.f32 %v83, %v74
    %v85 = vadd.f32 %v81, %v84
    %s86 = sld [smem:[#allocation7 + $0x2]]
    %v87 = vstv %s86
    %v88 = vmul.f32 %v87, %v76
    %v89 = vadd.f32 %v85, %v88
    %s90 = sld [smem:[#allocation7 + $0x3]]
    %v91 = vstv %s90
    %v92 = vmul.f32 %v91, %v78
    %v93 = vadd.f32 %v89, %v92
    %s94 = sld [smem:[#allocation8]]
    %v95 = vstv %s94
    %v96 = vadd.f32 %v93, %v95
    %v97 = vmul.f32 %v96, 0.5
    %v98 = vtanh.pop %v97
    %v99 = vmul.f32 %v98, 0.5
    %v100 = vadd.f32 %v99, 0.5
    %s101 = sld [smem:[#allocation10]]
    %v102 = vstv %s101
    %v103 = vmul.f32 %v102, %v100
    %s104 = sld [smem:[#allocation7 + $0x4]]
    %v105 = vstv %s104
    %v106 = vmul.f32 %v105, %v72
    %s107 = sld [smem:[#allocation7 + $0x5]]
    %v108 = vstv %s107
    %v109 = vmul.f32 %v108, %v74
    %v110 = vadd.f32 %v106, %v109
    %s111 = sld [smem:[#allocation7 + $0x6]]
    %v112 = vstv %s111
    %v113 = vmul.f32 %v112, %v76
    %v114 = vadd.f32 %v110, %v113
    %s115 = sld [smem:[#allocation7 + $0x7]]
    %v116 = vstv %s115
    %v117 = vmul.f32 %v116, %v78
    %v118 = vadd.f32 %v114, %v117
    %s119 = sld [smem:[#allocation8 + $0x1]]
    %v120 = vstv %s119
    %v121 = vadd.f32 %v118, %v120
    %v122 = vmul.f32 %v121, 0.5
    %v123 = vtanh.pop %v122
    %v124 = vmul.f32 %v123, 0.5
    %v125 = vadd.f32 %v124, 0.5
    %s126 = sld [smem:[#allocation10 + $0x1]]
    %v127 = vstv %s126
    %v128 = vmul.f32 %v127, %v125
    %v129 = vadd.f32 %v103, %v128
    %s130 = sld [smem:[#allocation7 + $0x8]]
    %v131 = vstv %s130
    %v132 = vmul.f32 %v131, %v72
    %s133 = sld [smem:[#allocation7 + $0x9]]
    %v134 = vstv %s133
    %v135 = vmul.f32 %v134, %v74
    %v136 = vadd.f32 %v132, %v135
    %s137 = sld [smem:[#allocation7 + $0xa]]
    %v138 = vstv %s137
    %v139 = vmul.f32 %v138, %v76
    %v140 = vadd.f32 %v136, %v139
    %s141 = sld [smem:[#allocation7 + $0xb]]
    %v142 = vstv %s141
    %v143 = vmul.f32 %v142, %v78
    %v144 = vadd.f32 %v140, %v143
    %s145 = sld [smem:[#allocation8 + $0x2]]
    %v146 = vstv %s145
    %v147 = vadd.f32 %v144, %v146
    %v148 = vmul.f32 %v147, 0.5
    %v149 = vtanh.pop %v148
    %v150 = vmul.f32 %v149, 0.5
    %v151 = vadd.f32 %v150, 0.5
    %s152 = sld [smem:[#allocation10 + $0x2]]
    %v153 = vstv %s152
    %v154 = vmul.f32 %v153, %v151
    %v155 = vadd.f32 %v129, %v154
    %s156 = sld [smem:[#allocation7 + $0xc]]
    %v157 = vstv %s156
    %v158 = vmul.f32 %v157, %v72
    %s159 = sld [smem:[#allocation7 + $0xd]]
    %v160 = vstv %s159
    %v161 = vmul.f32 %v160, %v74
    %v162 = vadd.f32 %v158, %v161
    %s163 = sld [smem:[#allocation7 + $0xe]]
    %v164 = vstv %s163
    %v165 = vmul.f32 %v164, %v76
    %v166 = vadd.f32 %v162, %v165
    %s167 = sld [smem:[#allocation7 + $0xf]]
    %v168 = vstv %s167
    %v169 = vmul.f32 %v168, %v78
    %v170 = vadd.f32 %v166, %v169
    %s171 = sld [smem:[#allocation8 + $0x3]]
    %v172 = vstv %s171
    %v173 = vadd.f32 %v170, %v172
    %v174 = vmul.f32 %v173, 0.5
    %v175 = vtanh.pop %v174
    %v176 = vmul.f32 %v175, 0.5
    %v177 = vadd.f32 %v176, 0.5
    %s178 = sld [smem:[#allocation10 + $0x3]]
    %v179 = vstv %s178
    %v180 = vmul.f32 %v179, %v177
    %v181 = vadd.f32 %v155, %v180
    %s182 = sld [smem:[#allocation7 + $0x10]]
    %v183 = vstv %s182
    %v184 = vmul.f32 %v183, %v72
    %s185 = sld [smem:[#allocation7 + $0x11]]
    %v186 = vstv %s185
    %v187 = vmul.f32 %v186, %v74
    %v188 = vadd.f32 %v184, %v187
    %s189 = sld [smem:[#allocation7 + $0x12]]
    %v190 = vstv %s189
    %v191 = vmul.f32 %v190, %v76
    %v192 = vadd.f32 %v188, %v191
    %s193 = sld [smem:[#allocation7 + $0x13]]
    %v194 = vstv %s193
    %v195 = vmul.f32 %v194, %v78
    %v196 = vadd.f32 %v192, %v195
    %s197 = sld [smem:[#allocation8 + $0x4]]
    %v198 = vstv %s197
    %v199 = vadd.f32 %v196, %v198
    %v200 = vmul.f32 %v199, 0.5
    %v201 = vtanh.pop %v200
    %v202 = vmul.f32 %v201, 0.5
    %v203 = vadd.f32 %v202, 0.5
    %s204 = sld [smem:[#allocation10 + $0x4]]
    %v205 = vstv %s204
    %v206 = vmul.f32 %v205, %v203
    %v207 = vadd.f32 %v181, %v206
    %s208 = sld [smem:[#allocation7 + $0x14]]
    %v209 = vstv %s208
    %v210 = vmul.f32 %v209, %v72
    %s211 = sld [smem:[#allocation7 + $0x15]]
    %v212 = vstv %s211
    %v213 = vmul.f32 %v212, %v74
    %v214 = vadd.f32 %v210, %v213
    %s215 = sld [smem:[#allocation7 + $0x16]]
    %v216 = vstv %s215
    %v217 = vmul.f32 %v216, %v76
    %v218 = vadd.f32 %v214, %v217
    %s219 = sld [smem:[#allocation7 + $0x17]]
    %v220 = vstv %s219
    %v221 = vmul.f32 %v220, %v78
    %v222 = vadd.f32 %v218, %v221
    %s223 = sld [smem:[#allocation8 + $0x5]]
    %v224 = vstv %s223
    %v225 = vadd.f32 %v222, %v224
    %v226 = vmul.f32 %v225, 0.5
    %v227 = vtanh.pop %v226
    %v228 = vmul.f32 %v227, 0.5
    %v229 = vadd.f32 %v228, 0.5
    %s230 = sld [smem:[#allocation10 + $0x5]]
    %v231 = vstv %s230
    %v232 = vmul.f32 %v231, %v229
    %v233 = vadd.f32 %v207, %v232
    %s234 = sld [smem:[#allocation7 + $0x18]]
    %v235 = vstv %s234
    %v236 = vmul.f32 %v235, %v72
    %s237 = sld [smem:[#allocation7 + $0x19]]
    %v238 = vstv %s237
    %v239 = vmul.f32 %v238, %v74
    %v240 = vadd.f32 %v236, %v239
    %s241 = sld [smem:[#allocation7 + $0x1a]]
    %v242 = vstv %s241
    %v243 = vmul.f32 %v242, %v76
    %v244 = vadd.f32 %v240, %v243
    %s245 = sld [smem:[#allocation7 + $0x1b]]
    %v246 = vstv %s245
    %v247 = vmul.f32 %v246, %v78
    %v248 = vadd.f32 %v244, %v247
    %s249 = sld [smem:[#allocation8 + $0x6]]
    %v250 = vstv %s249
    %v251 = vadd.f32 %v248, %v250
    %v252 = vmul.f32 %v251, 0.5
    %v253 = vtanh.pop %v252
    %v254 = vmul.f32 %v253, 0.5
    %v255 = vadd.f32 %v254, 0.5
    %s256 = sld [smem:[#allocation10 + $0x6]]
    %v257 = vstv %s256
    %v258 = vmul.f32 %v257, %v255
    %v259 = vadd.f32 %v233, %v258
    %s260 = sld [smem:[#allocation7 + $0x1c]]
    %v261 = vstv %s260
    %v262 = vmul.f32 %v261, %v72
    %s263 = sld [smem:[#allocation7 + $0x1d]]
    %v264 = vstv %s263
    %v265 = vmul.f32 %v264, %v74
    %v266 = vadd.f32 %v262, %v265
    %s267 = sld [smem:[#allocation7 + $0x1e]]
    %v268 = vstv %s267
    %v269 = vmul.f32 %v268, %v76
    %v270 = vadd.f32 %v266, %v269
    %s271 = sld [smem:[#allocation7 + $0x1f]]
    %v272 = vstv %s271
    %v273 = vmul.f32 %v272, %v78
    %v274 = vadd.f32 %v270, %v273
    %s275 = sld [smem:[#allocation8 + $0x7]]
    %v276 = vstv %s275
    %v277 = vadd.f32 %v274, %v276
    %v278 = vmul.f32 %v277, 0.5
    %v279 = vtanh.pop %v278
    %v280 = vmul.f32 %v279, 0.5
    %v281 = vadd.f32 %v280, 0.5
    %s282 = sld [smem:[#allocation10 + $0x7]]
    %v283 = vstv %s282
    %v284 = vmul.f32 %v283, %v281
    %v285 = vadd.f32 %v259, %v284
    %s286 = sld [smem:[#allocation7 + $0x20]]
    %v287 = vstv %s286
    %v288 = vmul.f32 %v287, %v72
    %s289 = sld [smem:[#allocation7 + $0x21]]
    %v290 = vstv %s289
    %v291 = vmul.f32 %v290, %v74
    %v292 = vadd.f32 %v288, %v291
    %s293 = sld [smem:[#allocation7 + $0x22]]
    %v294 = vstv %s293
    %v295 = vmul.f32 %v294, %v76
    %v296 = vadd.f32 %v292, %v295
    %s297 = sld [smem:[#allocation7 + $0x23]]
    %v298 = vstv %s297
    %v299 = vmul.f32 %v298, %v78
    %v300 = vadd.f32 %v296, %v299
    %s301 = sld [smem:[#allocation8 + $0x8]]
    %v302 = vstv %s301
    %v303 = vadd.f32 %v300, %v302
    %v304 = vmul.f32 %v303, 0.5
    %v305 = vtanh.pop %v304
    %v306 = vmul.f32 %v305, 0.5
    %v307 = vadd.f32 %v306, 0.5
    %s308 = sld [smem:[#allocation10 + $0x8]]
    %v309 = vstv %s308
    %v310 = vmul.f32 %v309, %v307
    %v311 = vadd.f32 %v285, %v310
    %s312 = sld [smem:[#allocation7 + $0x24]]
    %v313 = vstv %s312
    %v314 = vmul.f32 %v313, %v72
    %s315 = sld [smem:[#allocation7 + $0x25]]
    %v316 = vstv %s315
    %v317 = vmul.f32 %v316, %v74
    %v318 = vadd.f32 %v314, %v317
    %s319 = sld [smem:[#allocation7 + $0x26]]
    %v320 = vstv %s319
    %v321 = vmul.f32 %v320, %v76
    %v322 = vadd.f32 %v318, %v321
    %s323 = sld [smem:[#allocation7 + $0x27]]
    %v324 = vstv %s323
    %v325 = vmul.f32 %v324, %v78
    %v326 = vadd.f32 %v322, %v325
    %s327 = sld [smem:[#allocation8 + $0x9]]
    %v328 = vstv %s327
    %v329 = vadd.f32 %v326, %v328
    %v330 = vmul.f32 %v329, 0.5
    %v331 = vtanh.pop %v330
    %v332 = vmul.f32 %v331, 0.5
    %v333 = vadd.f32 %v332, 0.5
    %s334 = sld [smem:[#allocation10 + $0x9]]
    %v335 = vstv %s334
    %v336 = vmul.f32 %v335, %v333
    %v337 = vadd.f32 %v311, %v336
    %s338 = sld [smem:[#allocation2]]
    %v339 = vstv %s338
    %v340 = vadd.f32 %v337, %v339
    %v341 = vmul.f32 %v340, 0.5
    %v342 = vtanh.pop %v341
    %v343 = vmul.f32 %v342, 0.5
    %v344 = vadd.f32 %v343, 0.5
    %345 = vst [vmem:[#allocation11] sm:$0xff] %v344
    // Predicated region
    $region38: #{tpu_custom_call.1} parent=1 // pred_check
      _
    $region39: #{tpu_custom_call.1} parent=1 // pred_check_branch
      %347 = sbr.rel (0) target = $region41
    $region40: #{tpu_custom_call.1} parent=1 // pred_region
      %s349 = ssub.s32 128, 128
      %350 = vsyncadd [#allocation5], %s349
      %s352 = sshll.u32 [#allocation11], 4
      %s353 = int_to_ptr.vmem [resolvable:$true] %s352
      %355 = dma.vmem_to_hbm [thread:$0]  %s353, 128, %s5, [#allocation5]
    $region41: #{tpu_custom_call.1} parent=1 // pred_fallthru
      _
    // Predicated region
    $region42: #{tpu_custom_call.1} parent=1 // pred_check
      _
    $region43: #{tpu_custom_call.1} parent=1 // pred_check_branch
      %357 = sbr.rel (0) target = $region45
    $region44: #{tpu_custom_call.1} parent=1 // pred_region
      %358 = dma.done [#allocation5], 128
    $region45: #{tpu_custom_call.1} parent=1 // pred_fallthru
      _
    %359 = vsyncpa [#allocation4], 1
    %360 = vsyncpa [#allocation5], 1
    %361 = vsyncpa [#allocation6], 1
    %362 = vsyncpa [#allocation9], 1

</llo_original>
